<compile_context>
chip_gen: v7x
topology: tpu7x:2x2x1
jax: 0.10.0
libtpu: 0.0.40
codegen_flags: <defaults>
</compile_context>

<pallas_src>
import functools

import jax
import jax.numpy as jnp
from jax.experimental import pallas as pl
from jax.experimental.pallas import tpu as pltpu

_BN_EPS = 1e-5
_VMEM_LIMIT = 48 * 1024 * 1024          # stays under v7x's 64 MiB physical VMEM
_TILE_VMEM_BUDGET = 24 * 1024 * 1024    # double-buffered x + out tiles in the tiled path
_FAST_PATH_BYTES = 8 * 1024 * 1024      # fully-VMEM-resident single-call threshold


def _round_up(x, m):
    return ((x + m - 1) // m) * m


def _sublane(dtype):
    # dtype-dependent sublane packing: 8 rows for f32, 16 for bf16, 32 for int8/fp8
    return max(8, 32 // jnp.dtype(dtype).itemsize)


def _elu(x):
    # ELU(alpha=1): x if x > 0 else exp(x) - 1 (clamp so the unselected exp branch cannot overflow)
    return jnp.where(x > 0, x, jnp.exp(jnp.minimum(x, 0.0)) - 1.0)


def _mlp_tile(x, w1_ref, b1_ref, w2_ref, b2_ref):
    """Linear -> ELU -> (Dropout p=0, identity) -> Linear -> ELU on one row tile.
    Matmul operands stay in their native dtype (bf16 goes straight to the MXU);
    accumulation and all elementwise math are f32."""
    h = jnp.dot(x, w1_ref[...], preferred_element_type=jnp.float32)
    h = _elu(h + b1_ref[...].astype(jnp.float32))
    y = jnp.dot(h.astype(w2_ref.dtype), w2_ref[...], preferred_element_type=jnp.float32)
    return _elu(y + b2_ref[...].astype(jnp.float32))


# ----------------------------- fast path: single fused kernel -----------------------------
def _fused_kernel(x_ref, w1_ref, b1_ref, w2_ref, b2_ref, gamma_ref, beta_ref, o_ref,
                  *, n_valid_rows):
    y = _mlp_tile(x_ref[...], w1_ref, b1_ref, w2_ref, b2_ref)          # (R, n_out) f32
    rows = y.shape[0]
    row = jax.lax.broadcasted_iota(jnp.int32, (rows, 1), 0)
    valid = (row < n_valid_rows).astype(jnp.float32)                    # mask batch zero-padding
    n = jnp.float32(n_valid_rows)
    mean = jnp.sum(y * valid, axis=0, keepdims=True) / n
    d = (y - mean) * valid
    var = jnp.sum(d * d, axis=0, keepdims=True) / n                     # centered (stable) variance
    inv_std = jax.lax.rsqrt(var + _BN_EPS)
    g = gamma_ref[...].astype(jnp.float32)
    b = beta_ref[...].astype(jnp.float32)
    o_ref[...] = ((y - mean) * inv_std * g + b).astype(o_ref.dtype)


# ----------------------------- tiled path: two-phase BatchNorm -----------------------------
def _stats_kernel(x_ref, w1_ref, b1_ref, w2_ref, b2_ref, stats_ref,
                  *, tile_rows, n_valid_rows):
    """Pass 1: one packed (8, n_out) block per tile: sublanes 0-3 = sum, 4-7 = sum of squares."""
    y = _mlp_tile(x_ref[...], w1_ref, b1_ref, w2_ref, b2_ref)
    row = pl.program_id(0) * tile_rows + jax.lax.broadcasted_iota(jnp.int32, (tile_rows, 1), 0)
    valid = (row < n_valid_rows).astype(jnp.float32)
    y = y * valid
    s1 = jnp.sum(y, axis=0, keepdims=True)          # (1, n_out)
    s2 = jnp.sum(y * y, axis=0, keepdims=True)      # (1, n_out)
    sub_row = jax.lax.broadcasted_iota(jnp.int32, (8, 1), 0)
    stats_ref[...] = jnp.where(sub_row < 4,
                               jnp.broadcast_to(s1, stats_ref.shape),
                               jnp.broadcast_to(s2, stats_ref.shape))


def _apply_kernel(x_ref, w1_ref, b1_ref, w2_ref, b2_ref, scale_ref, shift_ref, o_ref):
    """Pass 2: recompute the MLP on the tile and apply the folded BatchNorm affine."""
    y = _mlp_tile(x_ref[...], w1_ref, b1_ref, w2_ref, b2_ref)
    o_ref[...] = (y * scale_ref[...] + shift_ref[...]).astype(o_ref.dtype)


def ref_nri_mlp(x, w1, b1, w2, b2, gamma, beta, *, tile_rows=8192, force_tiled=False):
    """x: (..., n_in) -> (..., n_out). Weights stored (in, out)."""
    n_in = x.shape[-1]
    n_hid = w1.shape[1]
    n_out = w2.shape[1]
    orig_shape = x.shape

    x2d = x.reshape(-1, n_in)
    n_rows = x2d.shape[0]
    sub = _sublane(x.dtype)

    b1_2d = b1.reshape(1, n_hid)
    b2_2d = b2.reshape(1, n_out)
    gamma_2d = gamma.reshape(1, n_out).astype(jnp.float32)
    beta_2d = beta.reshape(1, n_out).astype(jnp.float32)

    weight_bytes = (w1.size * w1.dtype.itemsize + b1.size * b1.dtype.itemsize
                    + w2.size * w2.dtype.itemsize + b2.size * b2.dtype.itemsize)

    # -------- Fast path: everything fits in VMEM -> one fused launch --------
    n_rows_fp = _round_up(n_rows, sub)
    act_bytes = n_rows_fp * (n_in + n_hid + 3 * n_out) * 4
    if (not force_tiled) and act_bytes + weight_bytes <= _FAST_PATH_BYTES:
        x_fp = x2d if n_rows_fp == n_rows else jnp.pad(x2d, ((0, n_rows_fp - n_rows), (0, 0)))
        out = pl.pallas_call(
            functools.partial(_fused_kernel, n_valid_rows=n_rows),
            out_shape=jax.ShapeDtypeStruct((n_rows_fp, n_out), x.dtype),
            compiler_params=pltpu.CompilerParams(vmem_limit_bytes=_VMEM_LIMIT),
            cost_estimate=pl.CostEstimate(
                flops=2 * n_rows_fp * (n_in * n_hid + n_hid * n_out) + 10 * n_rows_fp * n_out,
                transcendentals=n_rows_fp * (n_hid + n_out),
                bytes_accessed=x_fp.size * x_fp.dtype.itemsize + weight_bytes
                               + n_rows_fp * n_out * jnp.dtype(x.dtype).itemsize),
        )(x_fp, w1, b1_2d, w2, b2_2d, gamma_2d, beta_2d)
        return out[:n_rows].reshape(orig_shape[:-1] + (n_out,))

    # -------- Tiled two-pass path for large row counts --------
    out_itemsize = jnp.dtype(x.dtype).itemsize
    per_row_bytes = n_in * x2d.dtype.itemsize + n_out * max(out_itemsize, 4)
    tile_cap = max(sub, (_TILE_VMEM_BUDGET // (2 * per_row_bytes)) // sub * sub)
    tile = min(tile_rows, tile_cap, _round_up(n_rows, sub))
    tile = max(sub, (tile // sub) * sub)
    n_rows_pad = _round_up(n_rows, tile)
    n_tiles = n_rows_pad // tile
    if n_rows_pad != n_rows:
        x2d = jnp.pad(x2d, ((0, n_rows_pad - n_rows), (0, 0)))

    resident = lambda shape: pl.BlockSpec(shape, lambda i: (0, 0))
    cparams = pltpu.CompilerParams(
        dimension_semantics=("parallel",),          # megacore row-sharding on v7x; no-op on v5e/v6e
        vmem_limit_bytes=_VMEM_LIMIT,
    )

    mm_flops = 2 * n_rows_pad * (n_in * n_hid + n_hid * n_out)
    ew_flops = 4 * n_rows_pad * (n_hid + n_out)
    transc = n_rows_pad * (n_hid + n_out)
    x_bytes = x2d.size * x2d.dtype.itemsize

    # Pass 1: packed per-tile partial BN statistics.
    stats_part = pl.pallas_call(
        functools.partial(_stats_kernel, tile_rows=tile, n_valid_rows=n_rows),
        out_shape=jax.ShapeDtypeStruct((n_tiles * 8, n_out), jnp.float32),
        grid=(n_tiles,),
        in_specs=[
            pl.BlockSpec((tile, n_in), lambda i: (i, 0)),
            resident((n_in, n_hid)),
            resident((1, n_hid)),
            resident((n_hid, n_out)),
            resident((1, n_out)),
        ],
        out_specs=pl.BlockSpec((8, n_out), lambda i: (i, 0)),
        compiler_params=cparams,
        cost_estimate=pl.CostEstimate(
            flops=mm_flops + ew_flops + 3 * n_rows_pad * n_out,
            transcendentals=transc,
            bytes_accessed=x_bytes + weight_bytes + n_tiles * 8 * n_out * 4),
    )(x2d, w1, b1_2d, w2, b2_2d)

    # Tiny cross-tile reduction; fold BN into a per-feature affine (scale, shift).
    stats = stats_part.reshape(n_tiles, 8, n_out)
    s1 = stats[:, 0, :].sum(axis=0)
    s2 = stats[:, 4, :].sum(axis=0)
    n = jnp.float32(n_rows)
    mean = s1 / n
    var = jnp.maximum(s2 / n - mean * mean, 0.0)    # biased variance, like PyTorch BN forward
    inv_std = jax.lax.rsqrt(var + _BN_EPS)
    gamma_f = gamma.astype(jnp.float32)
    beta_f = beta.astype(jnp.float32)
    scale = (gamma_f * inv_std).reshape(1, n_out)
    shift = (beta_f - gamma_f * inv_std * mean).reshape(1, n_out)

    # Pass 2: recompute MLP per tile and apply folded BN (unpadded n_out stores).
    out_pad = pl.pallas_call(
        _apply_kernel,
        out_shape=jax.ShapeDtypeStruct((n_rows_pad, n_out), x.dtype),
        grid=(n_tiles,),
        in_specs=[
            pl.BlockSpec((tile, n_in), lambda i: (i, 0)),
            resident((n_in, n_hid)),
            resident((1, n_hid)),
            resident((n_hid, n_out)),
            resident((1, n_out)),
            resident((1, n_out)),
            resident((1, n_out)),
        ],
        out_specs=pl.BlockSpec((tile, n_out), lambda i: (i, 0)),
        compiler_params=cparams,
        cost_estimate=pl.CostEstimate(
            flops=mm_flops + ew_flops + 2 * n_rows_pad * n_out,
            transcendentals=transc,
            bytes_accessed=x_bytes + weight_bytes + n_rows_pad * n_out * out_itemsize),
    )(x2d, w1, b1_2d, w2, b2_2d, scale, shift)

    return out_pad[:n_rows, :].reshape(orig_shape[:-1] + (n_out,))


def init_params(key, n_in, n_hid, n_out):
    """Deterministic init matching RefNRIMLP.init_weights():
       xavier_normal_ on Linear weights, bias = 0.1, BN gamma = 1, beta = 0."""
    k1, k2 = jax.random.split(key)

    def xavier_normal(k, fan_in, fan_out):
        std = (2.0 / (fan_in + fan_out)) ** 0.5
        # stored as (in, out); std is symmetric in fan_in/fan_out so transpose-equivalent
        return std * jax.random.normal(k, (fan_in, fan_out), dtype=jnp.float32)

    w1 = xavier_normal(k1, n_in, n_hid)
    b1 = jnp.full((n_hid,), 0.1, dtype=jnp.float32)
    w2 = xavier_normal(k2, n_hid, n_out)
    b2 = jnp.full((n_out,), 0.1, dtype=jnp.float32)
    gamma = jnp.ones((n_out,), dtype=jnp.float32)
    beta = jnp.zeros((n_out,), dtype=jnp.float32)
    return w1, b1, w2, b2, gamma, beta


if __name__ == "__main__":
    # Small NRI-style shapes: batch=2, num_edges=8, n_in=16, n_hid=32, n_out=32
    B, E, n_in, n_hid, n_out = 2, 8, 16, 32, 32

    key = jax.random.PRNGKey(0)
    kx, kp = jax.random.split(key)
    x = jax.random.normal(kx, (B, E, n_in), dtype=jnp.float32)
    w1, b1, w2, b2, gamma, beta = init_params(kp, n_in, n_hid, n_out)

    # Pure-JAX reference (same math outside Pallas).
    def ref(x):
        x2d = x.reshape(-1, n_in)
        h = x2d @ w1 + b1
        h = jnp.where(h > 0, h, jnp.exp(h) - 1.0)
        y = h @ w2 + b2
        y = jnp.where(y > 0, y, jnp.exp(y) - 1.0)
        m = y.mean(0, keepdims=True)
        v = ((y - m) ** 2).mean(0, keepdims=True)
        y = (y - m) * jax.lax.rsqrt(v + 1e-5) * gamma + beta
        return y.reshape(B, E, n_out)

    ref_out = ref(x)

    # Fast (fused, single-launch) path -- the one that triggers at these shapes.
    out_fast = jax.block_until_ready(ref_nri_mlp(x, w1, b1, w2, b2, gamma, beta))
    assert out_fast.shape == (B, E, n_out), out_fast.shape
    err_fast = float(jnp.max(jnp.abs(out_fast - ref_out)))
    assert jnp.allclose(out_fast, ref_out, atol=1e-4, rtol=1e-4), err_fast

    # Tiled two-pass path (exercised explicitly so both kernels are compile-checked).
    out_tiled = jax.block_until_ready(
        ref_nri_mlp(x, w1, b1, w2, b2, gamma, beta, force_tiled=True))
    assert out_tiled.shape == (B, E, n_out), out_tiled.shape
    err_tiled = float(jnp.max(jnp.abs(out_tiled - ref_out)))
    assert jnp.allclose(out_tiled, ref_out, atol=1e-4, rtol=1e-4), err_tiled

    print("KERNEL_OK")
</pallas_src>

<mosaic_0001>
module attributes {stable_mosaic.version = 11 : i64} {
  func.func @_fused_kernel(%arg0: memref<16x16xf32, #tpu.memory_space<vmem>>, %arg1: memref<16x32xf32, #tpu.memory_space<vmem>>, %arg2: memref<1x32xf32, #tpu.memory_space<vmem>>, %arg3: memref<32x32xf32, #tpu.memory_space<vmem>>, %arg4: memref<1x32xf32, #tpu.memory_space<vmem>>, %arg5: memref<1x32xf32, #tpu.memory_space<vmem>>, %arg6: memref<1x32xf32, #tpu.memory_space<vmem>>, %arg7: memref<16x32xf32, #tpu.memory_space<vmem>>) attributes {dimension_semantics = [], scalar_prefetch = 0 : i64, scratch_operands = 0 : i64, tpu.core_type = #tpu.core_type<tc>} {
    %c0 = arith.constant 0 : index
    %c0_0 = arith.constant 0 : index
    %0 = vector.load %arg0[%c0, %c0_0] : memref<16x16xf32, #tpu.memory_space<vmem>>, vector<16x16xf32>
    %c0_1 = arith.constant 0 : index
    %c0_2 = arith.constant 0 : index
    %1 = vector.load %arg1[%c0_1, %c0_2] : memref<16x32xf32, #tpu.memory_space<vmem>>, vector<16x32xf32>
    %cst = arith.constant dense<0.000000e+00> : vector<16x32xf32>
    %2 = tpu.matmul %0, %1, %cst {dimension_numbers = #tpu.dot_dimension_numbers<[1], [0], [0], [1], [0, 0, 1, 1], [], []>} : vector<16x16xf32>, vector<16x32xf32>, vector<16x32xf32> -> vector<16x32xf32>
    %c0_3 = arith.constant 0 : index
    %c0_4 = arith.constant 0 : index
    %3 = vector.load %arg2[%c0_3, %c0_4] : memref<1x32xf32, #tpu.memory_space<vmem>>, vector<1x32xf32>
    %4 = vector.broadcast %3 : vector<1x32xf32> to vector<16x32xf32>
    %5 = arith.addf %2, %4 : vector<16x32xf32>
    %cst_5 = arith.constant 0.000000e+00 : f32
    %6 = vector.broadcast %cst_5 : f32 to vector<16x32xf32>
    %7 = arith.cmpf ogt, %5, %6 : vector<16x32xf32>
    %cst_6 = arith.constant 0.000000e+00 : f32
    %8 = vector.broadcast %cst_6 : f32 to vector<16x32xf32>
    %9 = arith.minimumf %5, %8 : vector<16x32xf32>
    %10 = math.exp %9 : vector<16x32xf32>
    %cst_7 = arith.constant 1.000000e+00 : f32
    %11 = vector.broadcast %cst_7 : f32 to vector<16x32xf32>
    %12 = arith.subf %10, %11 : vector<16x32xf32>
    %13 = arith.select %7, %5, %12 : vector<16x32xi1>, vector<16x32xf32>
    %c0_8 = arith.constant 0 : index
    %c0_9 = arith.constant 0 : index
    %14 = vector.load %arg3[%c0_8, %c0_9] : memref<32x32xf32, #tpu.memory_space<vmem>>, vector<32x32xf32>
    %cst_10 = arith.constant dense<0.000000e+00> : vector<16x32xf32>
    %15 = tpu.matmul %13, %14, %cst_10 {dimension_numbers = #tpu.dot_dimension_numbers<[1], [0], [0], [1], [0, 0, 1, 1], [], []>} : vector<16x32xf32>, vector<32x32xf32>, vector<16x32xf32> -> vector<16x32xf32>
    %c0_11 = arith.constant 0 : index
    %c0_12 = arith.constant 0 : index
    %16 = vector.load %arg4[%c0_11, %c0_12] : memref<1x32xf32, #tpu.memory_space<vmem>>, vector<1x32xf32>
    %17 = vector.broadcast %16 : vector<1x32xf32> to vector<16x32xf32>
    %18 = arith.addf %15, %17 : vector<16x32xf32>
    %cst_13 = arith.constant 0.000000e+00 : f32
    %19 = vector.broadcast %cst_13 : f32 to vector<16x32xf32>
    %20 = arith.cmpf ogt, %18, %19 : vector<16x32xf32>
    %cst_14 = arith.constant 0.000000e+00 : f32
    %21 = vector.broadcast %cst_14 : f32 to vector<16x32xf32>
    %22 = arith.minimumf %18, %21 : vector<16x32xf32>
    %23 = math.exp %22 : vector<16x32xf32>
    %cst_15 = arith.constant 1.000000e+00 : f32
    %24 = vector.broadcast %cst_15 : f32 to vector<16x32xf32>
    %25 = arith.subf %23, %24 : vector<16x32xf32>
    %26 = arith.select %20, %18, %25 : vector<16x32xi1>, vector<16x32xf32>
    %27 = tpu.iota {dimensions = array<i32: 0>} : vector<16x1xi32>
    %c16_i32 = arith.constant 16 : i32
    %28 = vector.broadcast %c16_i32 : i32 to vector<16x1xi32>
    %29 = arith.cmpi slt, %27, %28 : vector<16x1xi32>
    %30 = arith.extui %29 : vector<16x1xi1> to vector<16x1xi32>
    %31 = arith.sitofp %30 : vector<16x1xi32> to vector<16x1xf32>
    %32 = vector.broadcast %31 : vector<16x1xf32> to vector<16x32xf32>
    %33 = arith.mulf %26, %32 : vector<16x32xf32>
    %cst_16 = arith.constant dense<0.000000e+00> : vector<32xf32>
    %34 = vector.multi_reduction <add>, %33, %cst_16 [0] : vector<16x32xf32> to vector<32xf32>
    %35 = vector.shape_cast %34 : vector<32xf32> to vector<1x32xf32>
    %cst_17 = arith.constant 1.600000e+01 : f32
    %36 = vector.broadcast %cst_17 : f32 to vector<1x32xf32>
    %37 = arith.divf %35, %36 : vector<1x32xf32>
    %38 = vector.broadcast %37 : vector<1x32xf32> to vector<16x32xf32>
    %39 = arith.subf %26, %38 : vector<16x32xf32>
    %40 = vector.broadcast %31 : vector<16x1xf32> to vector<16x32xf32>
    %41 = arith.mulf %39, %40 : vector<16x32xf32>
    %42 = arith.mulf %41, %41 : vector<16x32xf32>
    %cst_18 = arith.constant dense<0.000000e+00> : vector<32xf32>
    %43 = vector.multi_reduction <add>, %42, %cst_18 [0] : vector<16x32xf32> to vector<32xf32>
    %44 = vector.shape_cast %43 : vector<32xf32> to vector<1x32xf32>
    %cst_19 = arith.constant 1.600000e+01 : f32
    %45 = vector.broadcast %cst_19 : f32 to vector<1x32xf32>
    %46 = arith.divf %44, %45 : vector<1x32xf32>
    %cst_20 = arith.constant 9.99999974E-6 : f32
    %47 = vector.broadcast %cst_20 : f32 to vector<1x32xf32>
    %48 = arith.addf %46, %47 : vector<1x32xf32>
    %49 = math.rsqrt %48 : vector<1x32xf32>
    %c0_21 = arith.constant 0 : index
    %c0_22 = arith.constant 0 : index
    %50 = vector.load %arg5[%c0_21, %c0_22] : memref<1x32xf32, #tpu.memory_space<vmem>>, vector<1x32xf32>
    %c0_23 = arith.constant 0 : index
    %c0_24 = arith.constant 0 : index
    %51 = vector.load %arg6[%c0_23, %c0_24] : memref<1x32xf32, #tpu.memory_space<vmem>>, vector<1x32xf32>
    %52 = vector.broadcast %37 : vector<1x32xf32> to vector<16x32xf32>
    %53 = arith.subf %26, %52 : vector<16x32xf32>
    %54 = vector.broadcast %49 : vector<1x32xf32> to vector<16x32xf32>
    %55 = arith.mulf %53, %54 : vector<16x32xf32>
    %56 = vector.broadcast %50 : vector<1x32xf32> to vector<16x32xf32>
    %57 = arith.mulf %55, %56 : vector<16x32xf32>
    %58 = vector.broadcast %51 : vector<1x32xf32> to vector<16x32xf32>
    %59 = arith.addf %57, %58 : vector<16x32xf32>
    %c0_25 = arith.constant 0 : index
    %c0_26 = arith.constant 0 : index
    %60 = vector.load %arg7[%c0_25, %c0_26] : memref<16x32xf32, #tpu.memory_space<vmem>>, vector<16x32xf32>
    tpu.vector_store %arg7[%c0_25, %c0_26], %59 {strides = array<i32>} : memref<16x32xf32, #tpu.memory_space<vmem>>, vector<16x32xf32>,
    return
  }
}

</mosaic_0001>

<llo_original>
// kernel: tpu_custom_call.1
$region0: #{tpu_custom_call.1}
  #allocation0 [shape = 'u32[]', space=smem, size = 0x4, offset = 0x4, fixed_abs, tag = 'smem constant byte address 0x4 - core index']
  #allocation1 [shape = 'u32[144,128]{1,0:T(1,128)}', space=vmem, size = 0x12000, scoped, tag = 'internal scratch']
  %s0 = inlined_call_operand.hbm [shape: f32[16,16], index: 0, kind: input, shape index: {}]
  %s1 = inlined_call_operand.hbm [shape: f32[16,32], index: 1, kind: input, shape index: {}]
  %s2 = inlined_call_operand.vmem [shape: f32[1,32], index: 2, kind: input, shape index: {}]
  %s3 = inlined_call_operand.hbm [shape: f32[32,32], index: 3, kind: input, shape index: {}]
  %s4 = inlined_call_operand.vmem [shape: f32[1,32], index: 4, kind: input, shape index: {}]
  %s5 = inlined_call_operand.vmem [shape: f32[1,32], index: 5, kind: input, shape index: {}]
  %s6 = inlined_call_operand.vmem [shape: f32[1,32], index: 6, kind: input, shape index: {}]
  %s7 = inlined_call_operand.hbm [shape: f32[16,32], index: 7, kind: output, shape index: {}]
  %s8 = sld [smem:[#allocation0]]
  $region50: #{tpu_custom_call.1} parent=0
    _
  %s10 = ssub.s32 1, %s8
  %s11 = scalar_select 0, %s10, %s8
  $region1: #{tpu_custom_call.1} parent=0
    #allocation2 [shape = 'u8[8192]{0}', space=vmem, size = 0x2000, scoped, tag = 'input window, operand 0, single buffered']
    #allocation3 [shape = 's32[1]{0}', space=sflag, size = 0x4, scoped, tag = 'scoped memory for tpu_custom_call.1']
    #allocation4 [shape = 's32[1]{0}', space=sflag, size = 0x4, scoped, tag = 'scoped memory for tpu_custom_call.1']
    #allocation5 [shape = 'u8[8192]{0}', space=vmem, size = 0x2000, scoped, tag = 'input window, operand 1, single buffered']
    #allocation6 [shape = 's32[1]{0}', space=sflag, size = 0x4, scoped, tag = 'scoped memory for tpu_custom_call.1']
    #allocation7 [shape = 'u8[16384]{0}', space=vmem, size = 0x4000, scoped, tag = 'input window, operand 3, single buffered']
    #allocation8 [shape = 'u8[8192]{0}', space=vmem, size = 0x2000, scoped, tag = 'output window, operand 0, single buffered']
    %12 = vsyncpa [#allocation3], 0
    %13 = vsyncpa [#allocation6], 0
    %14 = vsyncpa [#allocation4], 0
    // Predicated region
    $region2: #{tpu_custom_call.1} parent=1 // pred_check
      _
    $region3: #{tpu_custom_call.1} parent=1 // pred_check_branch
      %16 = sbr.rel (0) target = $region5
    $region4: #{tpu_custom_call.1} parent=1 // pred_region
      %s18 = ssub.s32 256, 256
      %19 = vsyncadd [#allocation3], %s18
      %s20 = sshll.u32 [#allocation2], 4
      %s21 = int_to_ptr.vmem [resolvable:$true] %s20
      %26 = dma.hbm_to_vmem [thread:$0]  %s0, 256, %s21, [#allocation3], 128, 128, 8
    $region5: #{tpu_custom_call.1} parent=1 // pred_fallthru
      _
    // Predicated region
    $region6: #{tpu_custom_call.1} parent=1 // pred_check
      _
    $region7: #{tpu_custom_call.1} parent=1 // pred_check_branch
      %28 = sbr.rel (0) target = $region9
    $region8: #{tpu_custom_call.1} parent=1 // pred_region
      %s30 = ssub.s32 256, 256
      %31 = vsyncadd [#allocation6], %s30
      %s32 = sshll.u32 [#allocation5], 4
      %s33 = int_to_ptr.vmem [resolvable:$true] %s32
      %38 = dma.hbm_to_vmem [thread:$0]  %s1, 256, %s33, [#allocation6], 128, 128, 8
    $region9: #{tpu_custom_call.1} parent=1 // pred_fallthru
      _
    // Predicated region
    $region10: #{tpu_custom_call.1} parent=1 // pred_check
      _
    $region11: #{tpu_custom_call.1} parent=1 // pred_check_branch
      %40 = sbr.rel (0) target = $region13
    $region12: #{tpu_custom_call.1} parent=1 // pred_region
      _
    $region13: #{tpu_custom_call.1} parent=1 // pred_fallthru
      _
    // Predicated region
    $region14: #{tpu_custom_call.1} parent=1 // pred_check
      _
    $region15: #{tpu_custom_call.1} parent=1 // pred_check_branch
      %42 = sbr.rel (0) target = $region17
    $region16: #{tpu_custom_call.1} parent=1 // pred_region
      %s44 = ssub.s32 512, 512
      %45 = vsyncadd [#allocation6], %s44
      %s46 = sshll.u32 [#allocation7], 4
      %s47 = int_to_ptr.vmem [resolvable:$true] %s46
      %52 = dma.hbm_to_vmem [thread:$0]  %s3, 512, %s47, [#allocation6], 128, 128, 8
    $region17: #{tpu_custom_call.1} parent=1 // pred_fallthru
      _
    // Predicated region
    $region18: #{tpu_custom_call.1} parent=1 // pred_check
      _
    $region19: #{tpu_custom_call.1} parent=1 // pred_check_branch
      %54 = sbr.rel (0) target = $region21
    $region20: #{tpu_custom_call.1} parent=1 // pred_region
      _
    $region21: #{tpu_custom_call.1} parent=1 // pred_fallthru
      _
    // Predicated region
    $region22: #{tpu_custom_call.1} parent=1 // pred_check
      _
    $region23: #{tpu_custom_call.1} parent=1 // pred_check_branch
      %56 = sbr.rel (0) target = $region25
    $region24: #{tpu_custom_call.1} parent=1 // pred_region
      _
    $region25: #{tpu_custom_call.1} parent=1 // pred_fallthru
      _
    // Predicated region
    $region26: #{tpu_custom_call.1} parent=1 // pred_check
      _
    $region27: #{tpu_custom_call.1} parent=1 // pred_check_branch
      %58 = sbr.rel (0) target = $region29
    $region28: #{tpu_custom_call.1} parent=1 // pred_region
      _
    $region29: #{tpu_custom_call.1} parent=1 // pred_fallthru
      _
    // Predicated region
    $region30: #{tpu_custom_call.1} parent=1 // pred_check
      _
    $region31: #{tpu_custom_call.1} parent=1 // pred_check_branch
      %60 = sbr.rel (0) target = $region33
    $region32: #{tpu_custom_call.1} parent=1 // pred_region
      %61 = dma.done [#allocation3], 256
    $region33: #{tpu_custom_call.1} parent=1 // pred_fallthru
      _
    // Predicated region
    $region34: #{tpu_custom_call.1} parent=1 // pred_check
      _
    $region35: #{tpu_custom_call.1} parent=1 // pred_check_branch
      %63 = sbr.rel (0) target = $region37
    $region36: #{tpu_custom_call.1} parent=1 // pred_region
      %64 = dma.done [#allocation6], 256
    $region37: #{tpu_custom_call.1} parent=1 // pred_fallthru
      _
    // Predicated region
    $region38: #{tpu_custom_call.1} parent=1 // pred_check
      _
    $region39: #{tpu_custom_call.1} parent=1 // pred_check_branch
      %66 = sbr.rel (0) target = $region41
    $region40: #{tpu_custom_call.1} parent=1 // pred_region
      %67 = dma.done [#allocation6], 512
    $region41: #{tpu_custom_call.1} parent=1 // pred_fallthru
      _
    %v68 = vld [vmem:[#allocation2] sm:$0xff]
    %v69 = vld [vmem:[#allocation2 + $0x8] sm:$0xff]
    %v70 = vld [vmem:[#allocation5] sm:$0xff]
    %v71 = vld [vmem:[#allocation5 + $0x8] sm:$0xff]
    %v72 = vld [vmem:[%s2] sm:$0x1]
    %v74 = vlaneseq
    %v75 = vshrl.u32 %v74, 7
    %v76 = vsub.s32 0, %v75
    %v77 = vrot.slane %v72, %v76
    %vm79 = vcmask 130048
    %v81 = vsel %vm79, %v68, 0
    %v84 = vsel %vm79, %v69, 0
    %86 = vmatprep.subr.mxu0 0.0
    %87 = vmatpush1.msra.mxu0 %v70
    %88 = vmatprep.subr.mxu0 0.0
    %89 = vmatpush1.msra.mxu0 %v71
    %90 = vmatprep.subr.mxu0 0.0
    %91 = vmatpush1.msra.mxu0 0.0
    %92 = vmatprep.subr.mxu0 0.0
    %93 = vmatpush1.msra.mxu0 0.0
    %94 = vmatprep.subr.mxu0 0.0
    %95 = vmatpush1.msra.mxu0 0.0
    %96 = vmatprep.subr.mxu0 0.0
    %97 = vmatpush1.msra.mxu0 0.0
    %98 = vmatprep.subr.mxu0 0.0
    %99 = vmatpush1.msra.mxu0 0.0
    %100 = vmatprep.subr.mxu0 0.0
    %101 = vmatpush1.msra.mxu0 0.0
    %102 = vmatprep.subr.mxu0 0.0
    %103 = vmatpush1.msra.mxu0 0.0
    %104 = vmatprep.subr.mxu0 0.0
    %105 = vmatpush1.msra.mxu0 0.0
    %106 = vmatprep.subr.mxu0 0.0
    %107 = vmatpush1.msra.mxu0 0.0
    %108 = vmatprep.subr.mxu0 0.0
    %109 = vmatpush1.msra.mxu0 0.0
    %110 = vmatprep.subr.mxu0 0.0
    %111 = vmatpush1.msra.mxu0 0.0
    %112 = vmatprep.subr.mxu0 0.0
    %113 = vmatpush1.msra.mxu0 0.0
    %114 = vmatprep.subr.mxu0 0.0
    %115 = vmatpush1.msra.mxu0 0.0
    %116 = vmatprep.subr.mxu0 0.0
    %117 = vmatpush1.msra.mxu0 0.0
    %118 = vmatprep.subr.mxu0 0.0
    %119 = vmatpush1.msra.mxu0 0.0
    %120 = vmatprep.subr.mxu0 0.0
    %121 = vmatpush1.msra.mxu0 0.0
    %122 = vmatprep.subr.mxu0 0.0
    %123 = vmatpush1.msra.mxu0 0.0
    %124 = vmatprep.subr.mxu0 0.0
    %125 = vmatpush1.msra.mxu0 0.0
    %126 = vmatprep.subr.mxu0 0.0
    %127 = vmatpush1.msra.mxu0 0.0
    %128 = vmatprep.subr.mxu0 0.0
    %129 = vmatpush1.msra.mxu0 0.0
    %130 = vmatprep.subr.mxu0 0.0
    %131 = vmatpush1.msra.mxu0 0.0
    %132 = vmatprep.subr.mxu0 0.0
    %133 = vmatpush1.msra.mxu0 0.0
    %134 = vmatprep.subr.mxu0 0.0
    %135 = vmatpush1.msra.mxu0 0.0
    %136 = vmatprep.subr.mxu0 0.0
    %137 = vmatpush1.msra.mxu0 0.0
    %138 = vmatprep.subr.mxu0 0.0
    %139 = vmatpush1.msra.mxu0 0.0
    %140 = vmatprep.subr.mxu0 0.0
    %141 = vmatpush1.msra.mxu0 0.0
    %142 = vmatprep.subr.mxu0 0.0
    %143 = vmatpush1.msra.mxu0 0.0
    %144 = vmatprep.subr.mxu0 0.0
    %145 = vmatpush1.msra.mxu0 0.0
    %146 = vmatprep.subr.mxu0 0.0
    %147 = vmatpush1.msra.mxu0 0.0
    %148 = vmatprep.subr.mxu0 0.0
    %149 = vmatpush1.msra.mxu0 0.0
    %150 = vmatprep.mubr.f32.mxu0 0.0
    %151 = vmatmul.mubr.f32.gmra.mrb[0].mxu0 %v81
    %v152 = vpop.f32.mrb[0].mxu0
    %v153 = vadd.f32 %v77, %v152
    %v154 = vpop.f32.mrb[0].mxu0
    %155 = vmatprep.mubr.f32.mxu0 0.0
    %156 = vmatmul.mubr.f32.gmra.mrb[0].mxu0 %v84
    %v157 = vpop.f32.mrb[0].mxu0
    %v158 = vadd.f32 %v77, %v157
    %v159 = vpop.f32.mrb[0].mxu0
    %160 = vdwg.mxu0
    %vm161 = vcmp.gt.f32.partialorder %v153, 0.0
    %vm162 = vcmp.gt.f32.partialorder %v158, 0.0
    %v163 = vmin.f32 %v153, 0.0
    %v164 = vmin.f32 %v158, 0.0
    %v165 = vmul.f32 %v163, 1.442695
    %v166 = vpow.pop %v165
    %v167 = vmul.f32 %v164, 1.442695
    %v168 = vpow.pop %v167
    %v169 = vsub.f32 %v166, 1.0
    %v170 = vsub.f32 %v168, 1.0
    %v171 = vsel %vm161, %v153, %v169
    %v172 = vsel %vm162, %v158, %v170
    %v173 = vld [vmem:[#allocation7] sm:$0xff]
    %v174 = vld [vmem:[#allocation7 + $0x8] sm:$0xff]
    %v175 = vld [vmem:[#allocation7 + $0x10] sm:$0xff]
    %v176 = vld [vmem:[#allocation7 + $0x18] sm:$0xff]
    %v177 = vld [vmem:[%s4] sm:$0x1]
    %v179 = vlaneseq
    %v180 = vshrl.u32 %v179, 7
    %v181 = vsub.s32 0, %v180
    %v182 = vrot.slane %v177, %v181
    %vm184 = vcmask 261120
    %v186 = vsel %vm184, %v171, 0
    %v189 = vsel %vm184, %v172, 0
    %191 = vmatprep.subr.mxu0 0.0
    %192 = vmatpush1.msra.mxu0 %v173
    %193 = vmatprep.subr.mxu0 0.0
    %194 = vmatpush1.msra.mxu0 %v174
    %195 = vmatprep.subr.mxu0 0.0
    %196 = vmatpush1.msra.mxu0 %v175
    %197 = vmatprep.subr.mxu0 0.0
    %198 = vmatpush1.msra.mxu0 %v176
    %199 = vmatprep.subr.mxu0 0.0
    %200 = vmatpush1.msra.mxu0 0.0
    %201 = vmatprep.subr.mxu0 0.0
    %202 = vmatpush1.msra.mxu0 0.0
    %203 = vmatprep.subr.mxu0 0.0
    %204 = vmatpush1.msra.mxu0 0.0
    %205 = vmatprep.subr.mxu0 0.0
    %206 = vmatpush1.msra.mxu0 0.0
    %207 = vmatprep.subr.mxu0 0.0
    %208 = vmatpush1.msra.mxu0 0.0
    %209 = vmatprep.subr.mxu0 0.0
    %210 = vmatpush1.msra.mxu0 0.0
    %211 = vmatprep.subr.mxu0 0.0
    %212 = vmatpush1.msra.mxu0 0.0
    %213 = vmatprep.subr.mxu0 0.0
    %214 = vmatpush1.msra.mxu0 0.0
    %215 = vmatprep.subr.mxu0 0.0
    %216 = vmatpush1.msra.mxu0 0.0
    %217 = vmatprep.subr.mxu0 0.0
    %218 = vmatpush1.msra.mxu0 0.0
    %219 = vmatprep.subr.mxu0 0.0
    %220 = vmatpush1.msra.mxu0 0.0
    %221 = vmatprep.subr.mxu0 0.0
    %222 = vmatpush1.msra.mxu0 0.0
    %223 = vmatprep.subr.mxu0 0.0
    %224 = vmatpush1.msra.mxu0 0.0
    %225 = vmatprep.subr.mxu0 0.0
    %226 = vmatpush1.msra.mxu0 0.0
    %227 = vmatprep.subr.mxu0 0.0
    %228 = vmatpush1.msra.mxu0 0.0
    %229 = vmatprep.subr.mxu0 0.0
    %230 = vmatpush1.msra.mxu0 0.0
    %231 = vmatprep.subr.mxu0 0.0
    %232 = vmatpush1.msra.mxu0 0.0
    %233 = vmatprep.subr.mxu0 0.0
    %234 = vmatpush1.msra.mxu0 0.0
    %235 = vmatprep.subr.mxu0 0.0
    %236 = vmatpush1.msra.mxu0 0.0
    %237 = vmatprep.subr.mxu0 0.0
    %238 = vmatpush1.msra.mxu0 0.0
    %239 = vmatprep.subr.mxu0 0.0
    %240 = vmatpush1.msra.mxu0 0.0
    %241 = vmatprep.subr.mxu0 0.0
    %242 = vmatpush1.msra.mxu0 0.0
    %243 = vmatprep.subr.mxu0 0.0
    %244 = vmatpush1.msra.mxu0 0.0
    %245 = vmatprep.subr.mxu0 0.0
    %246 = vmatpush1.msra.mxu0 0.0
    %247 = vmatprep.subr.mxu0 0.0
    %248 = vmatpush1.msra.mxu0 0.0
    %249 = vmatprep.subr.mxu0 0.0
    %250 = vmatpush1.msra.mxu0 0.0
    %251 = vmatprep.subr.mxu0 0.0
    %252 = vmatpush1.msra.mxu0 0.0
    %253 = vmatprep.subr.mxu0 0.0
    %254 = vmatpush1.msra.mxu0 0.0
    %255 = vmatprep.mubr.f32.mxu0 0.0
    %256 = vmatmul.mubr.f32.gmra.mrb[0].mxu0 %v186
    %v257 = vpop.f32.mrb[0].mxu0
    %v258 = vadd.f32 %v182, %v257
    %v259 = vpop.f32.mrb[0].mxu0
    %260 = vmatprep.mubr.f32.mxu0 0.0
    %261 = vmatmul.mubr.f32.gmra.mrb[0].mxu0 %v189
    %v262 = vpop.f32.mrb[0].mxu0
    %v263 = vadd.f32 %v182, %v262
    %v264 = vpop.f32.mrb[0].mxu0
    %265 = vdwg.mxu0
    %vm266 = vcmp.gt.f32.partialorder %v258, 0.0
    %vm267 = vcmp.gt.f32.partialorder %v263, 0.0
    %v268 = vmin.f32 %v258, 0.0
    %v269 = vmin.f32 %v263, 0.0
    %v270 = vmul.f32 %v268, 1.442695
    %v271 = vpow.pop %v270
    %v272 = vmul.f32 %v269, 1.442695
    %v273 = vpow.pop %v272
    %v274 = vsub.f32 %v271, 1.0
    %v275 = vsub.f32 %v273, 1.0
    %v276 = vsel %vm266, %v258, %v274
    %v277 = vsel %vm267, %v263, %v275
    %v278 = vlaneseq
    %v279 = vshrl.u32 %v278, 7
    %v280 = vadd.s32 %v279, 8
    %vm281 = vcmp.lt.s32.totalorder %v279, 16
    %vm282 = vcmp.lt.s32.totalorder %v280, 16
    %v283 = vsel %vm281, 1, 0
    %v284 = vsel %vm282, 1, 0
    %v285 = vcvt.s32.f32 %v283
    %v286 = vcvt.s32.f32 %v284
    %v287 = vmul.f32 %v276, %v285
    %v288 = vmul.f32 %v277, %v286
    %v289 = vsel %vm184, %v287, 0.0
    %v290 = vsel %vm184, %v288, 0.0
    %v291 = vadd.f32 %v289, %v290
    %v292 = vrot.slane %v291, 4
    %v293 = vadd.f32 %v291, %v292
    %v294 = vrot.slane %v293, 2
    %v295 = vadd.f32 %v293, %v294
    %v296 = vrot.slane %v295, 1
    %v297 = vadd.f32 %v295, %v296
    %v298 = vrcp.pop 16.0
    %v299 = vmul.f32 %v297, %v298
    %v300 = vsub.f32 %v276, %v299
    %v301 = vsub.f32 %v277, %v299
    %v302 = vmul.f32 %v300, %v285
    %v303 = vmul.f32 %v301, %v286
    %v304 = vmul.f32 %v302, %v302
    %v305 = vmul.f32 %v303, %v303
    %v306 = vsel %vm184, %v304, 0.0
    %v307 = vsel %vm184, %v305, 0.0
    %v308 = vadd.f32 %v306, %v307
    %v309 = vrot.slane %v308, 4
    %v310 = vadd.f32 %v308, %v309
    %v311 = vrot.slane %v310, 2
    %v312 = vadd.f32 %v310, %v311
    %v313 = vrot.slane %v312, 1
    %v314 = vadd.f32 %v312, %v313
    %v315 = vmul.f32 %v314, %v298
    %v316 = vadd.f32 %v315, 1e-05
    %v317 = vrsqrt.pop %v316
    %v318 = vld [vmem:[%s5] sm:$0x1]
    %v319 = vld [vmem:[%s6] sm:$0x1]
    %v320 = vmul.f32 %v300, %v317
    %v321 = vmul.f32 %v301, %v317
    %v323 = vlaneseq
    %v324 = vshrl.u32 %v323, 7
    %v325 = vsub.s32 0, %v324
    %v326 = vrot.slane %v318, %v325
    %v328 = vmul.f32 %v320, %v326
    %v329 = vmul.f32 %v321, %v326
    %v331 = vlaneseq
    %v332 = vshrl.u32 %v331, 7
    %v333 = vsub.s32 0, %v332
    %v334 = vrot.slane %v319, %v333
    %v336 = vadd.f32 %v328, %v334
    %v337 = vadd.f32 %v329, %v334
    %338 = vst.msk [vmem:[#allocation8] sm:$0xff] %vm184, %v336
    %339 = vst.msk [vmem:[#allocation8 + $0x8] sm:$0xff] %vm184, %v337
    // Predicated region
    $region42: #{tpu_custom_call.1} parent=1 // pred_check
      _
    $region43: #{tpu_custom_call.1} parent=1 // pred_check_branch
      %341 = sbr.rel (0) target = $region45
    $region44: #{tpu_custom_call.1} parent=1 // pred_region
      %s343 = ssub.s32 256, 256
      %344 = vsyncadd [#allocation4], %s343
      %s345 = sshll.u32 [#allocation8], 4
      %s346 = int_to_ptr.vmem [resolvable:$true] %s345
      %351 = dma.vmem_to_hbm [thread:$0]  %s346, 256, %s7, [#allocation4], 128, 128, 8
    $region45: #{tpu_custom_call.1} parent=1 // pred_fallthru
      _
    // Predicated region
    $region46: #{tpu_custom_call.1} parent=1 // pred_check
      _
    $region47: #{tpu_custom_call.1} parent=1 // pred_check_branch
      %353 = sbr.rel (0) target = $region49
    $region48: #{tpu_custom_call.1} parent=1 // pred_region
      %354 = dma.done [#allocation4], 256
    $region49: #{tpu_custom_call.1} parent=1 // pred_fallthru
      _
    %355 = vsyncpa [#allocation3], 1
    %356 = vsyncpa [#allocation6], 1
    %357 = vsyncpa [#allocation4], 1

</llo_original>
